<compile_context>
chip_gen: v6e
topology: v6e:2x2x1
jax: 0.10.0
libtpu: 0.0.40
codegen_flags: <defaults>
</compile_context>

<pallas_src>
import functools

import jax
import jax.numpy as jnp
from jax.experimental import pallas as pl
from jax.experimental.pallas import tpu as pltpu

# args defaults from the reference script
PROP_STEP = 2      # --prop_step
USE_RELU = False   # --relu

_LANE = 128        # TPU vreg lane width
_SUBLANE = 8


def _round_up(x, m):
    return (x + m - 1) // m * m


def _pad2d(x, rows, cols):
    return jnp.pad(x, ((0, rows - x.shape[0]), (0, cols - x.shape[1])))


def _gcn_fused_kernel(a_ref, x_ref, w1_ref, b1_ref, w2_ref, b2_ref, o_ref, *,
                      prop_step, apply_relu, l1_xw_first, l2_xw_first):
    """Whole GCN forward: h = A@X@W1+b1; repeat (prop_step-1)x: [relu?]; h = A@h@W2+b2."""
    # bf16 operands for the MXU, f32 accumulation; bias / ReLU kept in f32.
    a = a_ref[...].astype(jnp.bfloat16)

    def layer(h_f32, w_ref, b_ref, xw_first):
        w = w_ref[...].astype(jnp.bfloat16)
        h = h_f32.astype(jnp.bfloat16)
        if xw_first:   # (X @ W) first: cheaper when F_in > F_out
            hw = jnp.dot(h, w, preferred_element_type=jnp.float32)
            out = jnp.dot(a, hw.astype(jnp.bfloat16),
                          preferred_element_type=jnp.float32)
        else:          # (A @ X) first: cheaper when F_in <= F_out
            ah = jnp.dot(a, h, preferred_element_type=jnp.float32)
            out = jnp.dot(ah.astype(jnp.bfloat16), w,
                          preferred_element_type=jnp.float32)
        return out + b_ref[...]  # single f32 broadcast-add per layer

    h = layer(x_ref[...], w1_ref, b1_ref, l1_xw_first)
    for _ in range(1, prop_step):
        if apply_relu:
            h = jnp.maximum(h, 0.0)
        h = layer(h, w2_ref, b2_ref, l2_xw_first)
    o_ref[...] = h.astype(o_ref.dtype)


def gcn_forward(a_hat, x, params, *, prop_step=PROP_STEP, use_relu=USE_RELU):
    """GCN.forward as one fused pallas_call (all operands VMEM-resident)."""
    # TODO(synk): for large N (A_hat no longer VMEM-resident) split each GraphConv
    # into a row-tiled grid with a K-reduction accumulator + "parallel" row axis;
    # single-call fusion only holds while A_hat and the intermediate h fit in VMEM.
    w1, b1, w2, b2 = params
    n, f_in = x.shape
    f_hid = w1.shape[1]
    assert w2.shape == (f_hid, f_hid)

    # Zero-pad everything to lane-dense shapes (padding is exact: padded rows/cols
    # of A_hat, X, W, b are zero, so they never contribute to the real outputs).
    n_p = _round_up(n, _LANE)
    f_in_p = _round_up(f_in, _LANE)
    f_hid_p = _round_up(f_hid, _LANE)

    a_p = _pad2d(a_hat.astype(jnp.float32), n_p, n_p)
    x_p = _pad2d(x.astype(jnp.float32), n_p, f_in_p)
    w1_p = _pad2d(w1.astype(jnp.float32), f_in_p, f_hid_p)
    w2_p = _pad2d(w2.astype(jnp.float32), f_hid_p, f_hid_p)
    b1_p = _pad2d(b1.reshape(1, -1).astype(jnp.float32), 1, f_hid_p)
    b2_p = _pad2d(b2.reshape(1, -1).astype(jnp.float32), 1, f_hid_p)

    kernel = functools.partial(
        _gcn_fused_kernel,
        prop_step=prop_step,
        apply_relu=use_relu,
        l1_xw_first=f_in > f_hid,   # keep the N^2 matmul at width min(F_in, F_out)
        l2_xw_first=False,          # conv2 is square: order is a wash
    )

    vmem_spec = pl.BlockSpec(memory_space=pltpu.MemorySpace.VMEM)
    out_p = pl.pallas_call(
        kernel,
        out_shape=jax.ShapeDtypeStruct((n_p, f_hid_p), jnp.float32),
        in_specs=[vmem_spec] * 6,
        out_specs=vmem_spec,
        compiler_params=pltpu.CompilerParams(
            vmem_limit_bytes=32 * 1024 * 1024),
    )(a_p, x_p, w1_p, b1_p, w2_p, b2_p)

    return out_p[:n, :f_hid]


def glorot(key, shape):
    fan_in, fan_out = shape
    limit = jnp.sqrt(6.0 / (fan_in + fan_out))
    return jax.random.uniform(key, shape, jnp.float32, -limit, limit)


def build_normalized_adj(key, n):
    """Random symmetric graph with self-loops, normalized D^-1/2 A D^-1/2."""
    raw = jax.random.uniform(key, (n, n))
    adj = (raw < 0.2).astype(jnp.float32)
    adj = jnp.maximum(adj, adj.T)                  # symmetric
    adj = jnp.maximum(adj, jnp.eye(n))             # self-loops (no 0-degree nodes)
    deg = adj.sum(axis=1)
    d_inv_sqrt = 1.0 / jnp.sqrt(deg)
    return adj * d_inv_sqrt[:, None] * d_inv_sqrt[None, :]


if __name__ == "__main__":
    key = jax.random.PRNGKey(0)
    k_g, k_x, k_w1, k_w2 = jax.random.split(key, 4)

    N = 32          # number of graph nodes
    IN_FEATS = 16   # in_feats
    H_FEATS = 32    # h_feats

    a_hat = build_normalized_adj(k_g, N)
    x = jax.random.normal(k_x, (N, IN_FEATS), jnp.float32)

    # GraphConv params (deterministic glorot init, zero bias — DGL defaults)
    w1 = glorot(k_w1, (IN_FEATS, H_FEATS))
    b1 = jnp.zeros((H_FEATS,), jnp.float32)
    w2 = glorot(k_w2, (H_FEATS, H_FEATS))
    b2 = jnp.zeros((H_FEATS,), jnp.float32)

    fwd = jax.jit(gcn_forward)
    out = jax.block_until_ready(fwd(a_hat, x, (w1, b1, w2, b2)))

    # f32 reference; kernel uses bf16 MXU inputs with f32 accumulation, so the
    # tolerance is bf16-level rather than 1e-4.
    ref = a_hat @ (a_hat @ x @ w1 + b1) @ w2 + b2
    assert out.shape == (N, H_FEATS)
    err = float(jnp.max(jnp.abs(out - ref)))
    assert jnp.allclose(out, ref, atol=5e-2, rtol=5e-2), f"max abs err {err}"

    print("KERNEL_OK")
</pallas_src>

<mosaic_0001>
module attributes {stable_mosaic.version = 11 : i64} {
  func.func @_gcn_fused_kernel(%arg0: memref<128x128xf32, #tpu.memory_space<vmem>>, %arg1: memref<128x128xf32, #tpu.memory_space<vmem>>, %arg2: memref<128x128xf32, #tpu.memory_space<vmem>>, %arg3: memref<1x128xf32, #tpu.memory_space<vmem>>, %arg4: memref<128x128xf32, #tpu.memory_space<vmem>>, %arg5: memref<1x128xf32, #tpu.memory_space<vmem>>, %arg6: memref<128x128xf32, #tpu.memory_space<vmem>>) attributes {dimension_semantics = [], scalar_prefetch = 0 : i64, scratch_operands = 0 : i64, tpu.core_type = #tpu.core_type<tc>} {
    %c0 = arith.constant 0 : index
    %c0_0 = arith.constant 0 : index
    %0 = vector.load %arg0[%c0, %c0_0] : memref<128x128xf32, #tpu.memory_space<vmem>>, vector<128x128xf32>
    %1 = arith.truncf %0 : vector<128x128xf32> to vector<128x128xbf16>
    %c0_1 = arith.constant 0 : index
    %c0_2 = arith.constant 0 : index
    %2 = vector.load %arg1[%c0_1, %c0_2] : memref<128x128xf32, #tpu.memory_space<vmem>>, vector<128x128xf32>
    %c0_3 = arith.constant 0 : index
    %c0_4 = arith.constant 0 : index
    %3 = vector.load %arg2[%c0_3, %c0_4] : memref<128x128xf32, #tpu.memory_space<vmem>>, vector<128x128xf32>
    %4 = arith.truncf %3 : vector<128x128xf32> to vector<128x128xbf16>
    %5 = arith.truncf %2 : vector<128x128xf32> to vector<128x128xbf16>
    %cst = arith.constant dense<0.000000e+00> : vector<128x128xf32>
    %6 = tpu.matmul %1, %5, %cst {dimension_numbers = #tpu.dot_dimension_numbers<[1], [0], [0], [1], [0, 0, 1, 1], [], []>} : vector<128x128xbf16>, vector<128x128xbf16>, vector<128x128xf32> -> vector<128x128xf32>
    %7 = arith.truncf %6 : vector<128x128xf32> to vector<128x128xbf16>
    %cst_5 = arith.constant dense<0.000000e+00> : vector<128x128xf32>
    %8 = tpu.matmul %7, %4, %cst_5 {dimension_numbers = #tpu.dot_dimension_numbers<[1], [0], [0], [1], [0, 0, 1, 1], [], []>} : vector<128x128xbf16>, vector<128x128xbf16>, vector<128x128xf32> -> vector<128x128xf32>
    %c0_6 = arith.constant 0 : index
    %c0_7 = arith.constant 0 : index
    %9 = vector.load %arg3[%c0_6, %c0_7] : memref<1x128xf32, #tpu.memory_space<vmem>>, vector<1x128xf32>
    %10 = vector.broadcast %9 : vector<1x128xf32> to vector<128x128xf32>
    %11 = arith.addf %8, %10 : vector<128x128xf32>
    %c0_8 = arith.constant 0 : index
    %c0_9 = arith.constant 0 : index
    %12 = vector.load %arg4[%c0_8, %c0_9] : memref<128x128xf32, #tpu.memory_space<vmem>>, vector<128x128xf32>
    %13 = arith.truncf %12 : vector<128x128xf32> to vector<128x128xbf16>
    %14 = arith.truncf %11 : vector<128x128xf32> to vector<128x128xbf16>
    %cst_10 = arith.constant dense<0.000000e+00> : vector<128x128xf32>
    %15 = tpu.matmul %1, %14, %cst_10 {dimension_numbers = #tpu.dot_dimension_numbers<[1], [0], [0], [1], [0, 0, 1, 1], [], []>} : vector<128x128xbf16>, vector<128x128xbf16>, vector<128x128xf32> -> vector<128x128xf32>
    %16 = arith.truncf %15 : vector<128x128xf32> to vector<128x128xbf16>
    %cst_11 = arith.constant dense<0.000000e+00> : vector<128x128xf32>
    %17 = tpu.matmul %16, %13, %cst_11 {dimension_numbers = #tpu.dot_dimension_numbers<[1], [0], [0], [1], [0, 0, 1, 1], [], []>} : vector<128x128xbf16>, vector<128x128xbf16>, vector<128x128xf32> -> vector<128x128xf32>
    %c0_12 = arith.constant 0 : index
    %c0_13 = arith.constant 0 : index
    %18 = vector.load %arg5[%c0_12, %c0_13] : memref<1x128xf32, #tpu.memory_space<vmem>>, vector<1x128xf32>
    %19 = vector.broadcast %18 : vector<1x128xf32> to vector<128x128xf32>
    %20 = arith.addf %17, %19 : vector<128x128xf32>
    %c0_14 = arith.constant 0 : index
    %c0_15 = arith.constant 0 : index
    %21 = vector.load %arg6[%c0_14, %c0_15] : memref<128x128xf32, #tpu.memory_space<vmem>>, vector<128x128xf32>
    tpu.vector_store %arg6[%c0_14, %c0_15], %20 {strides = array<i32>} : memref<128x128xf32, #tpu.memory_space<vmem>>, vector<128x128xf32>,
    return
  }
}

</mosaic_0001>

<llo_original>
// kernel: gcn_forward.1
$region0: #{gcn_forward.1}
  #allocation0 [shape = 'u32[]', space=smem, size = 0x4, offset = 0x4, fixed_abs, tag = 'smem constant byte address 0x4 - core index']
  #allocation1 [shape = 'u32[144,128]{1,0:T(1,128)}', space=vmem, size = 0x12000, scoped, tag = 'internal scratch']
  %s0 = inlined_call_operand.vmem [shape: f32[128,128], index: 0, kind: input, shape index: {}]
  %s1 = inlined_call_operand.vmem [shape: f32[128,128], index: 1, kind: input, shape index: {}]
  %s2 = inlined_call_operand.vmem [shape: f32[128,128], index: 2, kind: input, shape index: {}]
  %s3 = inlined_call_operand.vmem [shape: f32[1,128], index: 3, kind: input, shape index: {}]
  %s4 = inlined_call_operand.vmem [shape: f32[128,128], index: 4, kind: input, shape index: {}]
  %s5 = inlined_call_operand.vmem [shape: f32[1,128], index: 5, kind: input, shape index: {}]
  %s6 = inlined_call_operand.vmem [shape: f32[128,128], index: 6, kind: output, shape index: {}]
  %s7 = sld [smem:[#allocation0]]
  $region34: #{gcn_forward.1} parent=0
    _
  %s9 = ssub.s32 1, %s7
  %s10 = scalar_select 0, %s9, %s7
  // Predicated region
  $region2: #{gcn_forward.1} parent=0 // pred_check
    _
  $region3: #{gcn_forward.1} parent=0 // pred_check_branch
    %12 = sbr.rel (0) target = $region5
  $region4: #{gcn_forward.1} parent=0 // pred_region
    _
  $region5: #{gcn_forward.1} parent=0 // pred_fallthru
    _
  // Predicated region
  $region6: #{gcn_forward.1} parent=0 // pred_check
    _
  $region7: #{gcn_forward.1} parent=0 // pred_check_branch
    %14 = sbr.rel (0) target = $region9
  $region8: #{gcn_forward.1} parent=0 // pred_region
    _
  $region9: #{gcn_forward.1} parent=0 // pred_fallthru
    _
  // Predicated region
  $region10: #{gcn_forward.1} parent=0 // pred_check
    _
  $region11: #{gcn_forward.1} parent=0 // pred_check_branch
    %16 = sbr.rel (0) target = $region13
  $region12: #{gcn_forward.1} parent=0 // pred_region
    _
  $region13: #{gcn_forward.1} parent=0 // pred_fallthru
    _
  // Predicated region
  $region14: #{gcn_forward.1} parent=0 // pred_check
    _
  $region15: #{gcn_forward.1} parent=0 // pred_check_branch
    %18 = sbr.rel (0) target = $region17
  $region16: #{gcn_forward.1} parent=0 // pred_region
    _
  $region17: #{gcn_forward.1} parent=0 // pred_fallthru
    _
  // Predicated region
  $region18: #{gcn_forward.1} parent=0 // pred_check
    _
  $region19: #{gcn_forward.1} parent=0 // pred_check_branch
    %20 = sbr.rel (0) target = $region21
  $region20: #{gcn_forward.1} parent=0 // pred_region
    _
  $region21: #{gcn_forward.1} parent=0 // pred_fallthru
    _
  // Predicated region
  $region22: #{gcn_forward.1} parent=0 // pred_check
    _
  $region23: #{gcn_forward.1} parent=0 // pred_check_branch
    %22 = sbr.rel (0) target = $region25
  $region24: #{gcn_forward.1} parent=0 // pred_region
    _
  $region25: #{gcn_forward.1} parent=0 // pred_fallthru
    _
  %v24 = vld [vmem:[%s0] sm:$0xff]
  %v25 = vld [vmem:[%s0 + $0x8] sm:$0xff]
  %v26 = vld [vmem:[%s0 + $0x10] sm:$0xff]
  %v27 = vld [vmem:[%s0 + $0x18] sm:$0xff]
  %v28 = vld [vmem:[%s0 + $0x20] sm:$0xff]
  %v29 = vld [vmem:[%s0 + $0x28] sm:$0xff]
  %v30 = vld [vmem:[%s0 + $0x30] sm:$0xff]
  %v31 = vld [vmem:[%s0 + $0x38] sm:$0xff]
  %v32 = vld [vmem:[%s0 + $0x40] sm:$0xff]
  %v33 = vld [vmem:[%s0 + $0x48] sm:$0xff]
  %v34 = vld [vmem:[%s0 + $0x50] sm:$0xff]
  %v35 = vld [vmem:[%s0 + $0x58] sm:$0xff]
  %v36 = vld [vmem:[%s0 + $0x60] sm:$0xff]
  %v37 = vld [vmem:[%s0 + $0x68] sm:$0xff]
  %v38 = vld [vmem:[%s0 + $0x70] sm:$0xff]
  %v39 = vld [vmem:[%s0 + $0x78] sm:$0xff]
  %v40 = vpack.c.bf16 %v25, %v24
  %v41 = vpack.c.bf16 %v27, %v26
  %v42 = vpack.c.bf16 %v29, %v28
  %v43 = vpack.c.bf16 %v31, %v30
  %v44 = vpack.c.bf16 %v33, %v32
  %v45 = vpack.c.bf16 %v35, %v34
  %v46 = vpack.c.bf16 %v37, %v36
  %v47 = vpack.c.bf16 %v39, %v38
  %v48 = vld [vmem:[%s1] sm:$0xff]
  %v49 = vld [vmem:[%s1 + $0x8] sm:$0xff]
  %v50 = vld [vmem:[%s1 + $0x10] sm:$0xff]
  %v51 = vld [vmem:[%s1 + $0x18] sm:$0xff]
  %v52 = vld [vmem:[%s1 + $0x20] sm:$0xff]
  %v53 = vld [vmem:[%s1 + $0x28] sm:$0xff]
  %v54 = vld [vmem:[%s1 + $0x30] sm:$0xff]
  %v55 = vld [vmem:[%s1 + $0x38] sm:$0xff]
  %v56 = vld [vmem:[%s1 + $0x40] sm:$0xff]
  %v57 = vld [vmem:[%s1 + $0x48] sm:$0xff]
  %v58 = vld [vmem:[%s1 + $0x50] sm:$0xff]
  %v59 = vld [vmem:[%s1 + $0x58] sm:$0xff]
  %v60 = vld [vmem:[%s1 + $0x60] sm:$0xff]
  %v61 = vld [vmem:[%s1 + $0x68] sm:$0xff]
  %v62 = vld [vmem:[%s1 + $0x70] sm:$0xff]
  %v63 = vld [vmem:[%s1 + $0x78] sm:$0xff]
  %v64 = vld [vmem:[%s2] sm:$0xff]
  %v65 = vld [vmem:[%s2 + $0x8] sm:$0xff]
  %v66 = vld [vmem:[%s2 + $0x10] sm:$0xff]
  %v67 = vld [vmem:[%s2 + $0x18] sm:$0xff]
  %v68 = vld [vmem:[%s2 + $0x20] sm:$0xff]
  %v69 = vld [vmem:[%s2 + $0x28] sm:$0xff]
  %v70 = vld [vmem:[%s2 + $0x30] sm:$0xff]
  %v71 = vld [vmem:[%s2 + $0x38] sm:$0xff]
  %v72 = vld [vmem:[%s2 + $0x40] sm:$0xff]
  %v73 = vld [vmem:[%s2 + $0x48] sm:$0xff]
  %v74 = vld [vmem:[%s2 + $0x50] sm:$0xff]
  %v75 = vld [vmem:[%s2 + $0x58] sm:$0xff]
  %v76 = vld [vmem:[%s2 + $0x60] sm:$0xff]
  %v77 = vld [vmem:[%s2 + $0x68] sm:$0xff]
  %v78 = vld [vmem:[%s2 + $0x70] sm:$0xff]
  %v79 = vld [vmem:[%s2 + $0x78] sm:$0xff]
  %v80 = vpack.c.bf16 %v65, %v64
  %v81 = vpack.c.bf16 %v67, %v66
  %v82 = vpack.c.bf16 %v69, %v68
  %v83 = vpack.c.bf16 %v71, %v70
  %v84 = vpack.c.bf16 %v73, %v72
  %v85 = vpack.c.bf16 %v75, %v74
  %v86 = vpack.c.bf16 %v77, %v76
  %v87 = vpack.c.bf16 %v79, %v78
  %v88 = vpack.c.bf16 %v49, %v48
  %v89 = vpack.c.bf16 %v51, %v50
  %v90 = vpack.c.bf16 %v53, %v52
  %v91 = vpack.c.bf16 %v55, %v54
  %v92 = vpack.c.bf16 %v57, %v56
  %v93 = vpack.c.bf16 %v59, %v58
  %v94 = vpack.c.bf16 %v61, %v60
  %v95 = vpack.c.bf16 %v63, %v62
  %96 = vmatprep.subr.bf16.mxu0 0
  %97 = vmatpush1.bf16.msra.mxu0 %v95
  %98 = vmatprep.subr.bf16.mxu0 0
  %99 = vmatpush1.bf16.msra.mxu0 %v94
  %100 = vmatprep.subr.bf16.mxu0 0
  %101 = vmatpush1.bf16.msra.mxu0 %v93
  %102 = vmatprep.subr.bf16.mxu0 0
  %103 = vmatpush1.bf16.msra.mxu0 %v92
  %104 = vmatprep.subr.bf16.mxu0 0
  %105 = vmatpush1.bf16.msra.mxu0 %v91
  %106 = vmatprep.subr.bf16.mxu0 0
  %107 = vmatpush1.bf16.msra.mxu0 %v90
  %108 = vmatprep.subr.bf16.mxu0 0
  %109 = vmatpush1.bf16.msra.mxu0 %v89
  %110 = vmatprep.subr.bf16.mxu0 0
  %111 = vmatpush1.bf16.msra.mxu0 %v88
  %112 = vmatprep.subr.bf16.mxu0 0
  %113 = vmatpush2.bf16.msra.mxu0 0
  %114 = vmatprep.subr.bf16.mxu0 0
  %115 = vmatpush2.bf16.msra.mxu0 0
  %116 = vmatprep.subr.bf16.mxu0 0
  %117 = vmatpush2.bf16.msra.mxu0 0
  %118 = vmatprep.subr.bf16.mxu0 0
  %119 = vmatpush2.bf16.msra.mxu0 0
  %120 = vmatprep.subr.bf16.mxu0 0
  %121 = vmatpush2.bf16.msra.mxu0 0
  %122 = vmatprep.subr.bf16.mxu0 0
  %123 = vmatpush2.bf16.msra.mxu0 0
  %124 = vmatprep.subr.bf16.mxu0 0
  %125 = vmatpush2.bf16.msra.mxu0 0
  %126 = vmatprep.subr.bf16.mxu0 0
  %127 = vmatpush2.bf16.msra.mxu0 0
  %128 = vmatprep.mubr.bf16.mxu0 0
  %129 = vmatmul.mubr.bf16.gmra.mxu0 %v40
  %v130 = vpop.f32.mrf.mxu0
  %v131 = vadd.f32 0.0, %v130
  %v132 = vpop.f32.mrf.mxu0
  %v133 = vpop.f32.mrf.mxu0
  %v134 = vadd.f32 0.0, %v133
  %v135 = vpop.f32.mrf.mxu0
  %136 = vmatprep.mubr.bf16.mxu0 0
  %137 = vmatmul.mubr.bf16.gmra.mxu0 %v41
  %v138 = vpop.f32.mrf.mxu0
  %v139 = vadd.f32 0.0, %v138
  %v140 = vpop.f32.mrf.mxu0
  %v141 = vpop.f32.mrf.mxu0
  %v142 = vadd.f32 0.0, %v141
  %v143 = vpop.f32.mrf.mxu0
  %144 = vmatprep.mubr.bf16.mxu0 0
  %145 = vmatmul.mubr.bf16.gmra.mxu0 %v42
  %v146 = vpop.f32.mrf.mxu0
  %v147 = vadd.f32 0.0, %v146
  %v148 = vpop.f32.mrf.mxu0
  %v149 = vpop.f32.mrf.mxu0
  %v150 = vadd.f32 0.0, %v149
  %v151 = vpop.f32.mrf.mxu0
  %152 = vmatprep.mubr.bf16.mxu0 0
  %153 = vmatmul.mubr.bf16.gmra.mxu0 %v43
  %v154 = vpop.f32.mrf.mxu0
  %v155 = vadd.f32 0.0, %v154
  %v156 = vpop.f32.mrf.mxu0
  %v157 = vpop.f32.mrf.mxu0
  %v158 = vadd.f32 0.0, %v157
  %v159 = vpop.f32.mrf.mxu0
  %160 = vmatprep.mubr.bf16.mxu0 0
  %161 = vmatmul.mubr.bf16.gmra.mxu0 %v44
  %v162 = vpop.f32.mrf.mxu0
  %v163 = vadd.f32 0.0, %v162
  %v164 = vpop.f32.mrf.mxu0
  %v165 = vpop.f32.mrf.mxu0
  %v166 = vadd.f32 0.0, %v165
  %v167 = vpop.f32.mrf.mxu0
  %168 = vmatprep.mubr.bf16.mxu0 0
  %169 = vmatmul.mubr.bf16.gmra.mxu0 %v45
  %v170 = vpop.f32.mrf.mxu0
  %v171 = vadd.f32 0.0, %v170
  %v172 = vpop.f32.mrf.mxu0
  %v173 = vpop.f32.mrf.mxu0
  %v174 = vadd.f32 0.0, %v173
  %v175 = vpop.f32.mrf.mxu0
  %176 = vmatprep.mubr.bf16.mxu0 0
  %177 = vmatmul.mubr.bf16.gmra.mxu0 %v46
  %v178 = vpop.f32.mrf.mxu0
  %v179 = vadd.f32 0.0, %v178
  %v180 = vpop.f32.mrf.mxu0
  %v181 = vpop.f32.mrf.mxu0
  %v182 = vadd.f32 0.0, %v181
  %v183 = vpop.f32.mrf.mxu0
  %184 = vmatprep.mubr.bf16.mxu0 0
  %185 = vmatmul.mubr.bf16.gmra.mxu0 %v47
  %v186 = vpop.f32.mrf.mxu0
  %v187 = vadd.f32 0.0, %v186
  %v188 = vpop.f32.mrf.mxu0
  %v189 = vpop.f32.mrf.mxu0
  %v190 = vadd.f32 0.0, %v189
  %v191 = vpop.f32.mrf.mxu0
  %192 = vdwg.mxu0
  %v193 = vpack.c.bf16 %v134, %v131
  %v194 = vpack.c.bf16 %v142, %v139
  %v195 = vpack.c.bf16 %v150, %v147
  %v196 = vpack.c.bf16 %v158, %v155
  %v197 = vpack.c.bf16 %v166, %v163
  %v198 = vpack.c.bf16 %v174, %v171
  %v199 = vpack.c.bf16 %v182, %v179
  %v200 = vpack.c.bf16 %v190, %v187
  %v201 = vld [vmem:[%s3] sm:$0x1]
  %v203 = vlaneseq
  %v204 = vshrl.u32 %v203, 7
  %v205 = vsub.s32 0, %v204
  %v206 = vrot.slane %v201, %v205
  %208 = vmatprep.subr.bf16.mxu0 0
  %209 = vmatpush1.bf16.msra.mxu0 %v87
  %210 = vmatprep.subr.bf16.mxu0 0
  %211 = vmatpush1.bf16.msra.mxu0 %v86
  %212 = vmatprep.subr.bf16.mxu0 0
  %213 = vmatpush1.bf16.msra.mxu0 %v85
  %214 = vmatprep.subr.bf16.mxu0 0
  %215 = vmatpush1.bf16.msra.mxu0 %v84
  %216 = vmatprep.subr.bf16.mxu0 0
  %217 = vmatpush1.bf16.msra.mxu0 %v83
  %218 = vmatprep.subr.bf16.mxu0 0
  %219 = vmatpush1.bf16.msra.mxu0 %v82
  %220 = vmatprep.subr.bf16.mxu0 0
  %221 = vmatpush1.bf16.msra.mxu0 %v81
  %222 = vmatprep.subr.bf16.mxu0 0
  %223 = vmatpush1.bf16.msra.mxu0 %v80
  %224 = vmatprep.subr.bf16.mxu0 0
  %225 = vmatpush2.bf16.msra.mxu0 0
  %226 = vmatprep.subr.bf16.mxu0 0
  %227 = vmatpush2.bf16.msra.mxu0 0
  %228 = vmatprep.subr.bf16.mxu0 0
  %229 = vmatpush2.bf16.msra.mxu0 0
  %230 = vmatprep.subr.bf16.mxu0 0
  %231 = vmatpush2.bf16.msra.mxu0 0
  %232 = vmatprep.subr.bf16.mxu0 0
  %233 = vmatpush2.bf16.msra.mxu0 0
  %234 = vmatprep.subr.bf16.mxu0 0
  %235 = vmatpush2.bf16.msra.mxu0 0
  %236 = vmatprep.subr.bf16.mxu0 0
  %237 = vmatpush2.bf16.msra.mxu0 0
  %238 = vmatprep.subr.bf16.mxu0 0
  %239 = vmatpush2.bf16.msra.mxu0 0
  %240 = vmatprep.mubr.bf16.mxu0 0
  %241 = vmatmul.mubr.bf16.gmra.mxu0 %v193
  %v242 = vpop.f32.mrf.mxu0
  %v243 = vadd.f32 %v206, %v242
  %v244 = vpop.f32.mrf.mxu0
  %v245 = vpop.f32.mrf.mxu0
  %v246 = vadd.f32 %v206, %v245
  %v247 = vpop.f32.mrf.mxu0
  %248 = vmatprep.mubr.bf16.mxu0 0
  %249 = vmatmul.mubr.bf16.gmra.mxu0 %v194
  %v250 = vpop.f32.mrf.mxu0
  %v251 = vadd.f32 %v206, %v250
  %v252 = vpop.f32.mrf.mxu0
  %v253 = vpop.f32.mrf.mxu0
  %v254 = vadd.f32 %v206, %v253
  %v255 = vpop.f32.mrf.mxu0
  %256 = vmatprep.mubr.bf16.mxu0 0
  %257 = vmatmul.mubr.bf16.gmra.mxu0 %v195
  %v258 = vpop.f32.mrf.mxu0
  %v259 = vadd.f32 %v206, %v258
  %v260 = vpop.f32.mrf.mxu0
  %v261 = vpop.f32.mrf.mxu0
  %v262 = vadd.f32 %v206, %v261
  %v263 = vpop.f32.mrf.mxu0
  %264 = vmatprep.mubr.bf16.mxu0 0
  %265 = vmatmul.mubr.bf16.gmra.mxu0 %v196
  %v266 = vpop.f32.mrf.mxu0
  %v267 = vadd.f32 %v206, %v266
  %v268 = vpop.f32.mrf.mxu0
  %v269 = vpop.f32.mrf.mxu0
  %v270 = vadd.f32 %v206, %v269
  %v271 = vpop.f32.mrf.mxu0
  %272 = vmatprep.mubr.bf16.mxu0 0
  %273 = vmatmul.mubr.bf16.gmra.mxu0 %v197
  %v274 = vpop.f32.mrf.mxu0
  %v275 = vadd.f32 %v206, %v274
  %v276 = vpop.f32.mrf.mxu0
  %v277 = vpop.f32.mrf.mxu0
  %v278 = vadd.f32 %v206, %v277
  %v279 = vpop.f32.mrf.mxu0
  %280 = vmatprep.mubr.bf16.mxu0 0
  %281 = vmatmul.mubr.bf16.gmra.mxu0 %v198
  %v282 = vpop.f32.mrf.mxu0
  %v283 = vadd.f32 %v206, %v282
  %v284 = vpop.f32.mrf.mxu0
  %v285 = vpop.f32.mrf.mxu0
  %v286 = vadd.f32 %v206, %v285
  %v287 = vpop.f32.mrf.mxu0
  %288 = vmatprep.mubr.bf16.mxu0 0
  %289 = vmatmul.mubr.bf16.gmra.mxu0 %v199
  %v290 = vpop.f32.mrf.mxu0
  %v291 = vadd.f32 %v206, %v290
  %v292 = vpop.f32.mrf.mxu0
  %v293 = vpop.f32.mrf.mxu0
  %v294 = vadd.f32 %v206, %v293
  %v295 = vpop.f32.mrf.mxu0
  %296 = vmatprep.mubr.bf16.mxu0 0
  %297 = vmatmul.mubr.bf16.gmra.mxu0 %v200
  %v298 = vpop.f32.mrf.mxu0
  %v299 = vadd.f32 %v206, %v298
  %v300 = vpop.f32.mrf.mxu0
  %v301 = vpop.f32.mrf.mxu0
  %v302 = vadd.f32 %v206, %v301
  %v303 = vpop.f32.mrf.mxu0
  %304 = vdwg.mxu0
  %v305 = vld [vmem:[%s4] sm:$0xff]
  %v306 = vld [vmem:[%s4 + $0x8] sm:$0xff]
  %v307 = vld [vmem:[%s4 + $0x10] sm:$0xff]
  %v308 = vld [vmem:[%s4 + $0x18] sm:$0xff]
  %v309 = vld [vmem:[%s4 + $0x20] sm:$0xff]
  %v310 = vld [vmem:[%s4 + $0x28] sm:$0xff]
  %v311 = vld [vmem:[%s4 + $0x30] sm:$0xff]
  %v312 = vld [vmem:[%s4 + $0x38] sm:$0xff]
  %v313 = vld [vmem:[%s4 + $0x40] sm:$0xff]
  %v314 = vld [vmem:[%s4 + $0x48] sm:$0xff]
  %v315 = vld [vmem:[%s4 + $0x50] sm:$0xff]
  %v316 = vld [vmem:[%s4 + $0x58] sm:$0xff]
  %v317 = vld [vmem:[%s4 + $0x60] sm:$0xff]
  %v318 = vld [vmem:[%s4 + $0x68] sm:$0xff]
  %v319 = vld [vmem:[%s4 + $0x70] sm:$0xff]
  %v320 = vld [vmem:[%s4 + $0x78] sm:$0xff]
  %v321 = vpack.c.bf16 %v306, %v305
  %v322 = vpack.c.bf16 %v308, %v307
  %v323 = vpack.c.bf16 %v310, %v309
  %v324 = vpack.c.bf16 %v312, %v311
  %v325 = vpack.c.bf16 %v314, %v313
  %v326 = vpack.c.bf16 %v316, %v315
  %v327 = vpack.c.bf16 %v318, %v317
  %v328 = vpack.c.bf16 %v320, %v319
  %v329 = vpack.c.bf16 %v246, %v243
  %v330 = vpack.c.bf16 %v254, %v251
  %v331 = vpack.c.bf16 %v262, %v259
  %v332 = vpack.c.bf16 %v270, %v267
  %v333 = vpack.c.bf16 %v278, %v275
  %v334 = vpack.c.bf16 %v286, %v283
  %v335 = vpack.c.bf16 %v294, %v291
  %v336 = vpack.c.bf16 %v302, %v299
  %337 = vmatprep.subr.bf16.mxu0 0
  %338 = vmatpush1.bf16.msra.mxu0 %v336
  %339 = vmatprep.subr.bf16.mxu0 0
  %340 = vmatpush1.bf16.msra.mxu0 %v335
  %341 = vmatprep.subr.bf16.mxu0 0
  %342 = vmatpush1.bf16.msra.mxu0 %v334
  %343 = vmatprep.subr.bf16.mxu0 0
  %344 = vmatpush1.bf16.msra.mxu0 %v333
  %345 = vmatprep.subr.bf16.mxu0 0
  %346 = vmatpush1.bf16.msra.mxu0 %v332
  %347 = vmatprep.subr.bf16.mxu0 0
  %348 = vmatpush1.bf16.msra.mxu0 %v331
  %349 = vmatprep.subr.bf16.mxu0 0
  %350 = vmatpush1.bf16.msra.mxu0 %v330
  %351 = vmatprep.subr.bf16.mxu0 0
  %352 = vmatpush1.bf16.msra.mxu0 %v329
  %353 = vmatprep.subr.bf16.mxu0 0
  %354 = vmatpush2.bf16.msra.mxu0 0
  %355 = vmatprep.subr.bf16.mxu0 0
  %356 = vmatpush2.bf16.msra.mxu0 0
  %357 = vmatprep.subr.bf16.mxu0 0
  %358 = vmatpush2.bf16.msra.mxu0 0
  %359 = vmatprep.subr.bf16.mxu0 0
  %360 = vmatpush2.bf16.msra.mxu0 0
  %361 = vmatprep.subr.bf16.mxu0 0
  %362 = vmatpush2.bf16.msra.mxu0 0
  %363 = vmatprep.subr.bf16.mxu0 0
  %364 = vmatpush2.bf16.msra.mxu0 0
  %365 = vmatprep.subr.bf16.mxu0 0
  %366 = vmatpush2.bf16.msra.mxu0 0
  %367 = vmatprep.subr.bf16.mxu0 0
  %368 = vmatpush2.bf16.msra.mxu0 0
  %369 = vmatprep.mubr.bf16.mxu0 0
  %370 = vmatmul.mubr.bf16.gmra.mxu0 %v40
  %v371 = vpop.f32.mrf.mxu0
  %v372 = vadd.f32 0.0, %v371
  %v373 = vpop.f32.mrf.mxu0
  %v374 = vpop.f32.mrf.mxu0
  %v375 = vadd.f32 0.0, %v374
  %v376 = vpop.f32.mrf.mxu0
  %377 = vmatprep.mubr.bf16.mxu0 0
  %378 = vmatmul.mubr.bf16.gmra.mxu0 %v41
  %v379 = vpop.f32.mrf.mxu0
  %v380 = vadd.f32 0.0, %v379
  %v381 = vpop.f32.mrf.mxu0
  %v382 = vpop.f32.mrf.mxu0
  %v383 = vadd.f32 0.0, %v382
  %v384 = vpop.f32.mrf.mxu0
  %385 = vmatprep.mubr.bf16.mxu0 0
  %386 = vmatmul.mubr.bf16.gmra.mxu0 %v42
  %v387 = vpop.f32.mrf.mxu0
  %v388 = vadd.f32 0.0, %v387
  %v389 = vpop.f32.mrf.mxu0
  %v390 = vpop.f32.mrf.mxu0
  %v391 = vadd.f32 0.0, %v390
  %v392 = vpop.f32.mrf.mxu0
  %393 = vmatprep.mubr.bf16.mxu0 0
  %394 = vmatmul.mubr.bf16.gmra.mxu0 %v43
  %v395 = vpop.f32.mrf.mxu0
  %v396 = vadd.f32 0.0, %v395
  %v397 = vpop.f32.mrf.mxu0
  %v398 = vpop.f32.mrf.mxu0
  %v399 = vadd.f32 0.0, %v398
  %v400 = vpop.f32.mrf.mxu0
  %401 = vmatprep.mubr.bf16.mxu0 0
  %402 = vmatmul.mubr.bf16.gmra.mxu0 %v44
  %v403 = vpop.f32.mrf.mxu0
  %v404 = vadd.f32 0.0, %v403
  %v405 = vpop.f32.mrf.mxu0
  %v406 = vpop.f32.mrf.mxu0
  %v407 = vadd.f32 0.0, %v406
  %v408 = vpop.f32.mrf.mxu0
  %409 = vmatprep.mubr.bf16.mxu0 0
  %410 = vmatmul.mubr.bf16.gmra.mxu0 %v45
  %v411 = vpop.f32.mrf.mxu0
  %v412 = vadd.f32 0.0, %v411
  %v413 = vpop.f32.mrf.mxu0
  %v414 = vpop.f32.mrf.mxu0
  %v415 = vadd.f32 0.0, %v414
  %v416 = vpop.f32.mrf.mxu0
  %417 = vmatprep.mubr.bf16.mxu0 0
  %418 = vmatmul.mubr.bf16.gmra.mxu0 %v46
  %v419 = vpop.f32.mrf.mxu0
  %v420 = vadd.f32 0.0, %v419
  %v421 = vpop.f32.mrf.mxu0
  %v422 = vpop.f32.mrf.mxu0
  %v423 = vadd.f32 0.0, %v422
  %v424 = vpop.f32.mrf.mxu0
  %425 = vmatprep.mubr.bf16.mxu0 0
  %426 = vmatmul.mubr.bf16.gmra.mxu0 %v47
  %v427 = vpop.f32.mrf.mxu0
  %v428 = vadd.f32 0.0, %v427
  %v429 = vpop.f32.mrf.mxu0
  %v430 = vpop.f32.mrf.mxu0
  %v431 = vadd.f32 0.0, %v430
  %v432 = vpop.f32.mrf.mxu0
  %433 = vdwg.mxu0
  %v434 = vpack.c.bf16 %v375, %v372
  %v435 = vpack.c.bf16 %v383, %v380
  %v436 = vpack.c.bf16 %v391, %v388
  %v437 = vpack.c.bf16 %v399, %v396
  %v438 = vpack.c.bf16 %v407, %v404
  %v439 = vpack.c.bf16 %v415, %v412
  %v440 = vpack.c.bf16 %v423, %v420
  %v441 = vpack.c.bf16 %v431, %v428
  %v442 = vld [vmem:[%s5] sm:$0x1]
  %v444 = vlaneseq
  %v445 = vshrl.u32 %v444, 7
  %v446 = vsub.s32 0, %v445
  %v447 = vrot.slane %v442, %v446
  %449 = vmatprep.subr.bf16.mxu0 0
  %450 = vmatpush1.bf16.msra.mxu0 %v328
  %451 = vmatprep.subr.bf16.mxu0 0
  %452 = vmatpush1.bf16.msra.mxu0 %v327
  %453 = vmatprep.subr.bf16.mxu0 0
  %454 = vmatpush1.bf16.msra.mxu0 %v326
  %455 = vmatprep.subr.bf16.mxu0 0
  %456 = vmatpush1.bf16.msra.mxu0 %v325
  %457 = vmatprep.subr.bf16.mxu0 0
  %458 = vmatpush1.bf16.msra.mxu0 %v324
  %459 = vmatprep.subr.bf16.mxu0 0
  %460 = vmatpush1.bf16.msra.mxu0 %v323
  %461 = vmatprep.subr.bf16.mxu0 0
  %462 = vmatpush1.bf16.msra.mxu0 %v322
  %463 = vmatprep.subr.bf16.mxu0 0
  %464 = vmatpush1.bf16.msra.mxu0 %v321
  %465 = vmatprep.subr.bf16.mxu0 0
  %466 = vmatpush2.bf16.msra.mxu0 0
  %467 = vmatprep.subr.bf16.mxu0 0
  %468 = vmatpush2.bf16.msra.mxu0 0
  %469 = vmatprep.subr.bf16.mxu0 0
  %470 = vmatpush2.bf16.msra.mxu0 0
  %471 = vmatprep.subr.bf16.mxu0 0
  %472 = vmatpush2.bf16.msra.mxu0 0
  %473 = vmatprep.subr.bf16.mxu0 0
  %474 = vmatpush2.bf16.msra.mxu0 0
  %475 = vmatprep.subr.bf16.mxu0 0
  %476 = vmatpush2.bf16.msra.mxu0 0
  %477 = vmatprep.subr.bf16.mxu0 0
  %478 = vmatpush2.bf16.msra.mxu0 0
  %479 = vmatprep.subr.bf16.mxu0 0
  %480 = vmatpush2.bf16.msra.mxu0 0
  %481 = vmatprep.mubr.bf16.mxu0 0
  %482 = vmatmul.mubr.bf16.gmra.mxu0 %v434
  %v483 = vpop.f32.mrf.mxu0
  %v484 = vadd.f32 %v447, %v483
  %v485 = vpop.f32.mrf.mxu0
  %v486 = vpop.f32.mrf.mxu0
  %v487 = vadd.f32 %v447, %v486
  %v488 = vpop.f32.mrf.mxu0
  %489 = vmatprep.mubr.bf16.mxu0 0
  %490 = vmatmul.mubr.bf16.gmra.mxu0 %v435
  %v491 = vpop.f32.mrf.mxu0
  %v492 = vadd.f32 %v447, %v491
  %v493 = vpop.f32.mrf.mxu0
  %v494 = vpop.f32.mrf.mxu0
  %v495 = vadd.f32 %v447, %v494
  %v496 = vpop.f32.mrf.mxu0
  %497 = vmatprep.mubr.bf16.mxu0 0
  %498 = vmatmul.mubr.bf16.gmra.mxu0 %v436
  %v499 = vpop.f32.mrf.mxu0
  %v500 = vadd.f32 %v447, %v499
  %v501 = vpop.f32.mrf.mxu0
  %v502 = vpop.f32.mrf.mxu0
  %v503 = vadd.f32 %v447, %v502
  %v504 = vpop.f32.mrf.mxu0
  %505 = vmatprep.mubr.bf16.mxu0 0
  %506 = vmatmul.mubr.bf16.gmra.mxu0 %v437
  %v507 = vpop.f32.mrf.mxu0
  %v508 = vadd.f32 %v447, %v507
  %v509 = vpop.f32.mrf.mxu0
  %v510 = vpop.f32.mrf.mxu0
  %v511 = vadd.f32 %v447, %v510
  %v512 = vpop.f32.mrf.mxu0
  %513 = vmatprep.mubr.bf16.mxu0 0
  %514 = vmatmul.mubr.bf16.gmra.mxu0 %v438
  %v515 = vpop.f32.mrf.mxu0
  %v516 = vadd.f32 %v447, %v515
  %v517 = vpop.f32.mrf.mxu0
  %v518 = vpop.f32.mrf.mxu0
  %v519 = vadd.f32 %v447, %v518
  %v520 = vpop.f32.mrf.mxu0
  %521 = vmatprep.mubr.bf16.mxu0 0
  %522 = vmatmul.mubr.bf16.gmra.mxu0 %v439
  %v523 = vpop.f32.mrf.mxu0
  %v524 = vadd.f32 %v447, %v523
  %v525 = vpop.f32.mrf.mxu0
  %v526 = vpop.f32.mrf.mxu0
  %v527 = vadd.f32 %v447, %v526
  %v528 = vpop.f32.mrf.mxu0
  %529 = vmatprep.mubr.bf16.mxu0 0
  %530 = vmatmul.mubr.bf16.gmra.mxu0 %v440
  %v531 = vpop.f32.mrf.mxu0
  %v532 = vadd.f32 %v447, %v531
  %v533 = vpop.f32.mrf.mxu0
  %v534 = vpop.f32.mrf.mxu0
  %v535 = vadd.f32 %v447, %v534
  %v536 = vpop.f32.mrf.mxu0
  %537 = vmatprep.mubr.bf16.mxu0 0
  %538 = vmatmul.mubr.bf16.gmra.mxu0 %v441
  %v539 = vpop.f32.mrf.mxu0
  %v540 = vadd.f32 %v447, %v539
  %v541 = vpop.f32.mrf.mxu0
  %v542 = vpop.f32.mrf.mxu0
  %v543 = vadd.f32 %v447, %v542
  %v544 = vpop.f32.mrf.mxu0
  %545 = vdwg.mxu0
  %546 = vst [vmem:[%s6] sm:$0xff] %v484
  %547 = vst [vmem:[%s6 + $0x8] sm:$0xff] %v487
  %548 = vst [vmem:[%s6 + $0x10] sm:$0xff] %v492
  %549 = vst [vmem:[%s6 + $0x18] sm:$0xff] %v495
  %550 = vst [vmem:[%s6 + $0x20] sm:$0xff] %v500
  %551 = vst [vmem:[%s6 + $0x28] sm:$0xff] %v503
  %552 = vst [vmem:[%s6 + $0x30] sm:$0xff] %v508
  %553 = vst [vmem:[%s6 + $0x38] sm:$0xff] %v511
  %554 = vst [vmem:[%s6 + $0x40] sm:$0xff] %v516
  %555 = vst [vmem:[%s6 + $0x48] sm:$0xff] %v519
  %556 = vst [vmem:[%s6 + $0x50] sm:$0xff] %v524
  %557 = vst [vmem:[%s6 + $0x58] sm:$0xff] %v527
  %558 = vst [vmem:[%s6 + $0x60] sm:$0xff] %v532
  %559 = vst [vmem:[%s6 + $0x68] sm:$0xff] %v535
  %560 = vst [vmem:[%s6 + $0x70] sm:$0xff] %v540
  %561 = vst [vmem:[%s6 + $0x78] sm:$0xff] %v543
  // Predicated region
  $region26: #{gcn_forward.1} parent=0 // pred_check
    _
  $region27: #{gcn_forward.1} parent=0 // pred_check_branch
    %563 = sbr.rel (0) target = $region29
  $region28: #{gcn_forward.1} parent=0 // pred_region
    _
  $region29: #{gcn_forward.1} parent=0 // pred_fallthru
    _
  // Predicated region
  $region30: #{gcn_forward.1} parent=0 // pred_check
    _
  $region31: #{gcn_forward.1} parent=0 // pred_check_branch
    %565 = sbr.rel (0) target = $region33
  $region32: #{gcn_forward.1} parent=0 // pred_region
    _
  $region33: #{gcn_forward.1} parent=0 // pred_fallthru
    _

</llo_original>
